<compile_context>
chip_gen: v7x
topology: tpu7x:2x2x1
jax: 0.10.0
libtpu: 0.0.40
codegen_flags: <defaults>
</compile_context>

<pallas_src>
import functools

import jax
import jax.numpy as jnp
from jax.experimental import pallas as pl
from jax.experimental.pallas import tpu as pltpu


# ----------------------------------------------------------------------------
# Pallas kernel: fused MLP  (Linear -> act -> Linear -> act -> 1-wide Linear)
# ----------------------------------------------------------------------------
def _mlp_disc_kernel(x_ref, w1_ref, b1_ref, w2_ref, b2_ref, w3r_ref, b3_ref,
                     *out_refs, hid_act, if_clamp, clamp_magnitude):
    def act(v):
        return jnp.maximum(v, 0.0) if hid_act == "relu" else jnp.tanh(v)

    compute_dtype = w1_ref.dtype  # bf16 on the hot path

    # Layer 1: bf16 MXU matmul, f32 accumulation, f32 activation.
    h = jnp.dot(x_ref[...], w1_ref[...],
                preferred_element_type=jnp.float32) + b1_ref[...]
    h = act(h)

    # Layer 2.
    h = jnp.dot(h.astype(compute_dtype), w2_ref[...],
                preferred_element_type=jnp.float32) + b2_ref[...]
    h = act(h)

    # Final Linear(hid, 1): VPU multiply + lane (XLU) reduction instead of an
    # N=1 MXU matmul that would use 1/256 of the systolic array.
    out = jnp.sum(h * w3r_ref[...], axis=-1, keepdims=True) + b3_ref[...]

    out_refs[0][...] = out.astype(out_refs[0].dtype)
    if if_clamp:
        out_refs[1][...] = jnp.clip(out, -clamp_magnitude, clamp_magnitude).astype(
            out_refs[1].dtype)


# ----------------------------------------------------------------------------
# Glue: parameter init, spectral norm, pallas_call wrapper
# ----------------------------------------------------------------------------
def _linear_init(key, in_dim, out_dim):
    """Deterministic PyTorch-style Linear init: W (out, in), b (out,)."""
    k_w, k_b = jax.random.split(key)
    bound = 1.0 / jnp.sqrt(in_dim)
    w = jax.random.uniform(k_w, (out_dim, in_dim), jnp.float32, -bound, bound)
    b = jax.random.uniform(k_b, (out_dim,), jnp.float32, -bound, bound)
    return w, b


def _spectral_norm(key, w, n_power_iterations=1, eps=1e-12):
    """One deterministic power-iteration step, mimicking torch spectral_norm."""
    out_dim, _ = w.shape
    u = jax.random.normal(key, (out_dim,), jnp.float32)
    u = u / jnp.maximum(jnp.linalg.norm(u), eps)
    for _ in range(n_power_iterations):
        v = w.T @ u
        v = v / jnp.maximum(jnp.linalg.norm(v), eps)
        u = w @ v
        u = u / jnp.maximum(jnp.linalg.norm(u), eps)
    sigma = u @ (w @ v)
    return w / sigma


def make_mlp_disc_params(key, input_dim, hid_dim, use_sn=True):
    """Params for MLPDisc(input_dim, num_layer_blocks=2, hid_dim, use_sn)."""
    keys = jax.random.split(key, 6)
    w1, b1 = _linear_init(keys[0], input_dim, hid_dim)
    w2, b2 = _linear_init(keys[1], hid_dim, hid_dim)
    w3, b3 = _linear_init(keys[2], hid_dim, 1)
    if use_sn:
        w1 = _spectral_norm(keys[3], w1)
        w2 = _spectral_norm(keys[4], w2)
        w3 = _spectral_norm(keys[5], w3)
    # Kernel layouts: W1/W2 as (in, out) bf16 for x @ W on the MXU; the final
    # (1, hid) weight stays as a f32 row for the VPU reduction; biases (1, out).
    return dict(
        w1=w1.T.astype(jnp.bfloat16), b1=b1.reshape(1, -1).astype(jnp.float32),
        w2=w2.T.astype(jnp.bfloat16), b2=b2.reshape(1, -1).astype(jnp.float32),
        w3_row=w3.reshape(1, -1).astype(jnp.float32),
        b3=b3.reshape(1, 1).astype(jnp.float32),
    )


def _round_up(a, m):
    return (a + m - 1) // m * m


def mlp_disc_forward(x, params, *, hid_act="relu", if_clamp=False,
                     clamp_magnitude=10.0, max_tile_b=1024):
    """Returns (output, output_clamp) if if_clamp else (output, output)."""
    assert hid_act in ("relu", "tanh")
    B, input_dim = x.shape
    hid_dim = params["w1"].shape[1]

    # Batch tile: multiple of 8 (sublane), capped so bf16 x/weight tiles plus
    # double buffers stay far below v7x's 32 MiB default scoped VMEM.
    tile_b = min(_round_up(B, 8), max_tile_b)
    b_pad = _round_up(B, tile_b)
    x_bf = x.astype(jnp.bfloat16)
    if b_pad != B:
        x_bf = jnp.pad(x_bf, ((0, b_pad - B), (0, 0)))

    grid = (b_pad // tile_b,)

    # x / out stream over the batch; weights & biases VMEM-resident (block
    # index constant across the grid -> no re-DMA per step).
    x_spec = pl.BlockSpec((tile_b, input_dim), lambda i: (i, 0))
    out_spec = pl.BlockSpec((tile_b, 1), lambda i: (i, 0))
    resident = lambda shape: pl.BlockSpec(shape, lambda i: (0, 0))

    in_specs = [
        x_spec,
        resident((input_dim, hid_dim)),   # w1
        resident((1, hid_dim)),           # b1
        resident((hid_dim, hid_dim)),     # w2
        resident((1, hid_dim)),           # b2
        resident((1, hid_dim)),           # w3_row
        resident((1, 1)),                 # b3
    ]

    num_out = 2 if if_clamp else 1
    out_shape = tuple(jax.ShapeDtypeStruct((b_pad, 1), jnp.float32)
                      for _ in range(num_out))
    out_specs = tuple(out_spec for _ in range(num_out))
    if num_out == 1:
        out_shape, out_specs = out_shape[0], out_specs[0]

    kernel = functools.partial(
        _mlp_disc_kernel,
        hid_act=hid_act, if_clamp=if_clamp, clamp_magnitude=clamp_magnitude)

    result = pl.pallas_call(
        kernel,
        out_shape=out_shape,
        grid=grid,
        in_specs=in_specs,
        out_specs=out_specs,
        compiler_params=pltpu.CompilerParams(
            dimension_semantics=("parallel",)),  # shards across TCs on v7x
    )(x_bf, params["w1"], params["b1"], params["w2"], params["b2"],
      params["w3_row"], params["b3"])

    if if_clamp:
        out, out_clamp = result
        return out[:B], out_clamp[:B]
    out = result[:B]
    return out, out  # module returns (output, output) when if_clamp is False


# ----------------------------------------------------------------------------
# Pure-JAX reference mirroring the kernel's bf16/f32 mixed precision
# ----------------------------------------------------------------------------
def _reference(x, p, hid_act="relu", if_clamp=False, clamp_magnitude=10.0):
    act = (lambda v: jnp.maximum(v, 0.0)) if hid_act == "relu" else jnp.tanh
    xb = x.astype(jnp.bfloat16)
    h = act(jnp.dot(xb, p["w1"], preferred_element_type=jnp.float32) + p["b1"])
    h = act(jnp.dot(h.astype(jnp.bfloat16), p["w2"],
                    preferred_element_type=jnp.float32) + p["b2"])
    out = jnp.sum(h * p["w3_row"], axis=-1, keepdims=True) + p["b3"]
    if if_clamp:
        return out, jnp.clip(out, -clamp_magnitude, clamp_magnitude)
    return out, out


if __name__ == "__main__":
    # Small shapes consistent with the module: batch=8, input_dim=16, hid_dim=32
    B, INPUT_DIM, HID_DIM = 8, 16, 32

    key = jax.random.PRNGKey(0)
    k_param, k_x = jax.random.split(key)

    params = make_mlp_disc_params(k_param, INPUT_DIM, HID_DIM, use_sn=True)
    x = jax.random.normal(k_x, (B, INPUT_DIM), jnp.float32)

    # if_clamp=False path (single kernel output, wrapper returns (out, out)).
    out, out2 = mlp_disc_forward(x, params, hid_act="relu", if_clamp=False)
    jax.block_until_ready(out)
    ref_out, ref_out2 = _reference(x, params, hid_act="relu", if_clamp=False)
    assert jnp.allclose(out, ref_out, atol=1e-3, rtol=1e-3)
    assert jnp.allclose(out2, ref_out2, atol=1e-3, rtol=1e-3)

    # if_clamp=True path (two kernel outputs).
    out_c, out_clamp = mlp_disc_forward(x, params, hid_act="relu",
                                        if_clamp=True, clamp_magnitude=0.05)
    jax.block_until_ready(out_clamp)
    ref_c, ref_clamp = _reference(x, params, hid_act="relu",
                                  if_clamp=True, clamp_magnitude=0.05)
    assert jnp.allclose(out_c, ref_c, atol=1e-3, rtol=1e-3)
    assert jnp.allclose(out_clamp, ref_clamp, atol=1e-3, rtol=1e-3)

    print("KERNEL_OK")
</pallas_src>

<mosaic_0001>
module attributes {stable_mosaic.version = 11 : i64} {
  func.func @_mlp_disc_kernel(%arg0: i32, %arg1: memref<8x16xbf16, #tpu.memory_space<vmem>>, %arg2: memref<16x32xbf16, #tpu.memory_space<vmem>>, %arg3: memref<1x32xf32, #tpu.memory_space<vmem>>, %arg4: memref<32x32xbf16, #tpu.memory_space<vmem>>, %arg5: memref<1x32xf32, #tpu.memory_space<vmem>>, %arg6: memref<1x32xf32, #tpu.memory_space<vmem>>, %arg7: memref<1x1xf32, #tpu.memory_space<vmem>>, %arg8: memref<8x1xf32, #tpu.memory_space<vmem>>) attributes {dimension_semantics = [#tpu.dimension_semantics<parallel>], iteration_bounds = array<i64: 1>, scalar_prefetch = 0 : i64, scratch_operands = 0 : i64, tpu.core_type = #tpu.core_type<tc>, window_params = [{transform_indices = @transform_0, window_bounds = array<i64: 8, 16>}, {pipeline_mode = #tpu.pipeline_mode<synchronous>, transform_indices = @transform_1, window_bounds = array<i64: 16, 32>}, {pipeline_mode = #tpu.pipeline_mode<synchronous>, transform_indices = @transform_2, window_bounds = array<i64: 1, 32>}, {pipeline_mode = #tpu.pipeline_mode<synchronous>, transform_indices = @transform_3, window_bounds = array<i64: 32, 32>}, {pipeline_mode = #tpu.pipeline_mode<synchronous>, transform_indices = @transform_4, window_bounds = array<i64: 1, 32>}, {pipeline_mode = #tpu.pipeline_mode<synchronous>, transform_indices = @transform_5, window_bounds = array<i64: 1, 32>}, {pipeline_mode = #tpu.pipeline_mode<synchronous>, transform_indices = @transform_6, window_bounds = array<i64: 1, 1>}, {transform_indices = @transform_7, window_bounds = array<i64: 8, 1>}]} {
    %c0 = arith.constant 0 : index
    %c0_0 = arith.constant 0 : index
    %0 = vector.load %arg1[%c0, %c0_0] : memref<8x16xbf16, #tpu.memory_space<vmem>>, vector<8x16xbf16>
    %c0_1 = arith.constant 0 : index
    %c0_2 = arith.constant 0 : index
    %1 = vector.load %arg2[%c0_1, %c0_2] : memref<16x32xbf16, #tpu.memory_space<vmem>>, vector<16x32xbf16>
    %cst = arith.constant dense<0.000000e+00> : vector<8x32xf32>
    %2 = tpu.matmul %0, %1, %cst {dimension_numbers = #tpu.dot_dimension_numbers<[1], [0], [0], [1], [0, 0, 1, 1], [], []>} : vector<8x16xbf16>, vector<16x32xbf16>, vector<8x32xf32> -> vector<8x32xf32>
    %c0_3 = arith.constant 0 : index
    %c0_4 = arith.constant 0 : index
    %3 = vector.load %arg3[%c0_3, %c0_4] : memref<1x32xf32, #tpu.memory_space<vmem>>, vector<1x32xf32>
    %4 = vector.broadcast %3 : vector<1x32xf32> to vector<8x32xf32>
    %5 = arith.addf %2, %4 : vector<8x32xf32>
    %cst_5 = arith.constant 0.000000e+00 : f32
    %6 = vector.broadcast %cst_5 : f32 to vector<8x32xf32>
    %7 = arith.maximumf %5, %6 : vector<8x32xf32>
    %8 = arith.truncf %7 : vector<8x32xf32> to vector<8x32xbf16>
    %c0_6 = arith.constant 0 : index
    %c0_7 = arith.constant 0 : index
    %9 = vector.load %arg4[%c0_6, %c0_7] : memref<32x32xbf16, #tpu.memory_space<vmem>>, vector<32x32xbf16>
    %cst_8 = arith.constant dense<0.000000e+00> : vector<8x32xf32>
    %10 = tpu.matmul %8, %9, %cst_8 {dimension_numbers = #tpu.dot_dimension_numbers<[1], [0], [0], [1], [0, 0, 1, 1], [], []>} : vector<8x32xbf16>, vector<32x32xbf16>, vector<8x32xf32> -> vector<8x32xf32>
    %c0_9 = arith.constant 0 : index
    %c0_10 = arith.constant 0 : index
    %11 = vector.load %arg5[%c0_9, %c0_10] : memref<1x32xf32, #tpu.memory_space<vmem>>, vector<1x32xf32>
    %12 = vector.broadcast %11 : vector<1x32xf32> to vector<8x32xf32>
    %13 = arith.addf %10, %12 : vector<8x32xf32>
    %cst_11 = arith.constant 0.000000e+00 : f32
    %14 = vector.broadcast %cst_11 : f32 to vector<8x32xf32>
    %15 = arith.maximumf %13, %14 : vector<8x32xf32>
    %c0_12 = arith.constant 0 : index
    %c0_13 = arith.constant 0 : index
    %16 = vector.load %arg6[%c0_12, %c0_13] : memref<1x32xf32, #tpu.memory_space<vmem>>, vector<1x32xf32>
    %17 = vector.broadcast %16 : vector<1x32xf32> to vector<8x32xf32>
    %18 = arith.mulf %15, %17 : vector<8x32xf32>
    %cst_14 = arith.constant dense<0.000000e+00> : vector<8xf32>
    %19 = vector.multi_reduction <add>, %18, %cst_14 [1] : vector<8x32xf32> to vector<8xf32>
    %20 = vector.shape_cast %19 : vector<8xf32> to vector<8x1xf32>
    %c0_15 = arith.constant 0 : index
    %c0_16 = arith.constant 0 : index
    %21 = vector.load %arg7[%c0_15, %c0_16] : memref<1x1xf32, #tpu.memory_space<vmem>>, vector<1x1xf32>
    %22 = vector.broadcast %21 : vector<1x1xf32> to vector<8x1xf32>
    %23 = arith.addf %20, %22 : vector<8x1xf32>
    %c0_17 = arith.constant 0 : index
    %c0_18 = arith.constant 0 : index
    %24 = vector.load %arg8[%c0_17, %c0_18] : memref<8x1xf32, #tpu.memory_space<vmem>>, vector<8x1xf32>
    tpu.vector_store %arg8[%c0_17, %c0_18], %23 {strides = array<i32>} : memref<8x1xf32, #tpu.memory_space<vmem>>, vector<8x1xf32>,
    return
  }
  func.func @transform_0(%arg0: i32) -> (i32, i32) {
    %c0_i32 = arith.constant 0 : i32
    %c0_i32_0 = arith.constant 0 : i32
    return %arg0, %c0_i32 : i32, i32
  }
  func.func @transform_1(%arg0: i32) -> (i32, i32) {
    %c0_i32 = arith.constant 0 : i32
    %c0_i32_0 = arith.constant 0 : i32
    %c0_i32_1 = arith.constant 0 : i32
    return %c0_i32, %c0_i32_0 : i32, i32
  }
  func.func @transform_2(%arg0: i32) -> (i32, i32) {
    %c0_i32 = arith.constant 0 : i32
    %c0_i32_0 = arith.constant 0 : i32
    %c0_i32_1 = arith.constant 0 : i32
    return %c0_i32, %c0_i32_0 : i32, i32
  }
  func.func @transform_3(%arg0: i32) -> (i32, i32) {
    %c0_i32 = arith.constant 0 : i32
    %c0_i32_0 = arith.constant 0 : i32
    %c0_i32_1 = arith.constant 0 : i32
    return %c0_i32, %c0_i32_0 : i32, i32
  }
  func.func @transform_4(%arg0: i32) -> (i32, i32) {
    %c0_i32 = arith.constant 0 : i32
    %c0_i32_0 = arith.constant 0 : i32
    %c0_i32_1 = arith.constant 0 : i32
    return %c0_i32, %c0_i32_0 : i32, i32
  }
  func.func @transform_5(%arg0: i32) -> (i32, i32) {
    %c0_i32 = arith.constant 0 : i32
    %c0_i32_0 = arith.constant 0 : i32
    %c0_i32_1 = arith.constant 0 : i32
    return %c0_i32, %c0_i32_0 : i32, i32
  }
  func.func @transform_6(%arg0: i32) -> (i32, i32) {
    %c0_i32 = arith.constant 0 : i32
    %c0_i32_0 = arith.constant 0 : i32
    %c0_i32_1 = arith.constant 0 : i32
    return %c0_i32, %c0_i32_0 : i32, i32
  }
  func.func @transform_7(%arg0: i32) -> (i32, i32) {
    %c0_i32 = arith.constant 0 : i32
    %c0_i32_0 = arith.constant 0 : i32
    return %arg0, %c0_i32 : i32, i32
  }
}

</mosaic_0001>

<llo_original>
// kernel: tpu_custom_call.1
$region0: #{tpu_custom_call.1}
  #allocation0 [shape = 'u32[]', space=smem, size = 0x4, offset = 0x4, fixed_abs, tag = 'smem constant byte address 0x4 - core index']
  #allocation1 [shape = 'u32[144,128]{1,0:T(1,128)}', space=vmem, size = 0x12000, scoped, tag = 'internal scratch']
  #allocation2 [shape = 'f32[1,1]{1,0:T(1,128)S(1)}', space=vmem, size = 0x200, scoped, tag = 'scoped memory for tpu_custom_call.1']
  %s0 = inlined_call_operand.hbm [shape: bf16[8,16], index: 0, kind: input, shape index: {}]
  %s1 = inlined_call_operand.hbm [shape: bf16[16,32], index: 1, kind: input, shape index: {}]
  %s2 = inlined_call_operand.vmem [shape: f32[1,32], index: 2, kind: input, shape index: {}]
  %s3 = inlined_call_operand.hbm [shape: bf16[32,32], index: 3, kind: input, shape index: {}]
  %s4 = inlined_call_operand.vmem [shape: f32[1,32], index: 4, kind: input, shape index: {}]
  %s5 = inlined_call_operand.vmem [shape: f32[1,32], index: 5, kind: input, shape index: {}]
  %s6 = inlined_call_operand.<no memory space> [shape: f32[1,1], index: 6, kind: input, shape index: {}]
  %s7 = inlined_call_operand.vmem [shape: f32[8,1], index: 7, kind: output, shape index: {}]
  %s8 = sld [smem:[#allocation0]]
  $region50: #{tpu_custom_call.1} parent=0
    _
  %s10 = ssub.s32 1, %s8
  %s11 = scalar_select 0, %s10, %s8
  %v12 = vstv %s6
  %13 = vst [vmem:[#allocation2] sm:$0x1] %v12
  $region1: #{tpu_custom_call.1} parent=0
    #allocation3 [shape = 'u8[2048]{0}', space=vmem, size = 0x800, scoped, tag = 'input window, operand 0, single buffered']
    #allocation4 [shape = 's32[1]{0}', space=sflag, size = 0x4, scoped, tag = 'scoped memory for tpu_custom_call.1']
    #allocation5 [shape = 'u8[4096]{0}', space=vmem, size = 0x1000, scoped, tag = 'input window, operand 1, single buffered']
    #allocation6 [shape = 's32[1]{0}', space=sflag, size = 0x4, scoped, tag = 'scoped memory for tpu_custom_call.1']
    #allocation7 [shape = 'u8[8192]{0}', space=vmem, size = 0x2000, scoped, tag = 'input window, operand 3, single buffered']
    %14 = vsyncpa [#allocation4], 0
    %15 = vsyncpa [#allocation6], 0
    // Predicated region
    $region2: #{tpu_custom_call.1} parent=1 // pred_check
      _
    $region3: #{tpu_custom_call.1} parent=1 // pred_check_branch
      %17 = sbr.rel (0) target = $region5
    $region4: #{tpu_custom_call.1} parent=1 // pred_region
      %s19 = ssub.s32 64, 64
      %20 = vsyncadd [#allocation4], %s19
      %s22 = sshll.u32 [#allocation3], 4
      %s23 = int_to_ptr.vmem [resolvable:$true] %s22
      %25 = dma.hbm_to_vmem [thread:$0]  %s0, 64, %s23, [#allocation4]
    $region5: #{tpu_custom_call.1} parent=1 // pred_fallthru
      _
    // Predicated region
    $region6: #{tpu_custom_call.1} parent=1 // pred_check
      _
    $region7: #{tpu_custom_call.1} parent=1 // pred_check_branch
      %27 = sbr.rel (0) target = $region9
    $region8: #{tpu_custom_call.1} parent=1 // pred_region
      %s29 = ssub.s32 128, 128
      %30 = vsyncadd [#allocation6], %s29
      %s31 = sshll.u32 [#allocation5], 4
      %s32 = int_to_ptr.vmem [resolvable:$true] %s31
      %37 = dma.hbm_to_vmem [thread:$0]  %s1, 128, %s32, [#allocation6], 64, 64, 4
    $region9: #{tpu_custom_call.1} parent=1 // pred_fallthru
      _
    // Predicated region
    $region10: #{tpu_custom_call.1} parent=1 // pred_check
      _
    $region11: #{tpu_custom_call.1} parent=1 // pred_check_branch
      %39 = sbr.rel (0) target = $region13
    $region12: #{tpu_custom_call.1} parent=1 // pred_region
      _
    $region13: #{tpu_custom_call.1} parent=1 // pred_fallthru
      _
    // Predicated region
    $region14: #{tpu_custom_call.1} parent=1 // pred_check
      _
    $region15: #{tpu_custom_call.1} parent=1 // pred_check_branch
      %41 = sbr.rel (0) target = $region17
    $region16: #{tpu_custom_call.1} parent=1 // pred_region
      %s43 = ssub.s32 256, 256
      %44 = vsyncadd [#allocation6], %s43
      %s45 = sshll.u32 [#allocation7], 4
      %s46 = int_to_ptr.vmem [resolvable:$true] %s45
      %51 = dma.hbm_to_vmem [thread:$0]  %s3, 256, %s46, [#allocation6], 64, 64, 4
    $region17: #{tpu_custom_call.1} parent=1 // pred_fallthru
      _
    // Predicated region
    $region18: #{tpu_custom_call.1} parent=1 // pred_check
      _
    $region19: #{tpu_custom_call.1} parent=1 // pred_check_branch
      %53 = sbr.rel (0) target = $region21
    $region20: #{tpu_custom_call.1} parent=1 // pred_region
      _
    $region21: #{tpu_custom_call.1} parent=1 // pred_fallthru
      _
    // Predicated region
    $region22: #{tpu_custom_call.1} parent=1 // pred_check
      _
    $region23: #{tpu_custom_call.1} parent=1 // pred_check_branch
      %55 = sbr.rel (0) target = $region25
    $region24: #{tpu_custom_call.1} parent=1 // pred_region
      _
    $region25: #{tpu_custom_call.1} parent=1 // pred_fallthru
      _
    // Predicated region
    $region26: #{tpu_custom_call.1} parent=1 // pred_check
      _
    $region27: #{tpu_custom_call.1} parent=1 // pred_check_branch
      %57 = sbr.rel (0) target = $region29
    $region28: #{tpu_custom_call.1} parent=1 // pred_region
      _
    $region29: #{tpu_custom_call.1} parent=1 // pred_fallthru
      _
    // Predicated region
    $region30: #{tpu_custom_call.1} parent=1 // pred_check
      _
    $region31: #{tpu_custom_call.1} parent=1 // pred_check_branch
      %59 = sbr.rel (0) target = $region33
    $region32: #{tpu_custom_call.1} parent=1 // pred_region
      %60 = dma.done [#allocation4], 64
    $region33: #{tpu_custom_call.1} parent=1 // pred_fallthru
      _
    // Predicated region
    $region34: #{tpu_custom_call.1} parent=1 // pred_check
      _
    $region35: #{tpu_custom_call.1} parent=1 // pred_check_branch
      %62 = sbr.rel (0) target = $region37
    $region36: #{tpu_custom_call.1} parent=1 // pred_region
      %63 = dma.done [#allocation6], 128
    $region37: #{tpu_custom_call.1} parent=1 // pred_fallthru
      _
    // Predicated region
    $region38: #{tpu_custom_call.1} parent=1 // pred_check
      _
    $region39: #{tpu_custom_call.1} parent=1 // pred_check_branch
      %65 = sbr.rel (0) target = $region41
    $region40: #{tpu_custom_call.1} parent=1 // pred_region
      %66 = dma.done [#allocation6], 256
    $region41: #{tpu_custom_call.1} parent=1 // pred_fallthru
      _
    %v68 = vld [vmem:[#allocation3] sm:$0xf]
    %v69 = vld [vmem:[#allocation5] sm:$0xf]
    %v70 = vld [vmem:[#allocation5 + $0x4] sm:$0xf]
    %v71 = vld [vmem:[%s2] sm:$0x1]
    %v73 = vlaneseq
    %v74 = vshrl.u32 %v73, 7
    %v75 = vsub.s32 0, %v74
    %v76 = vrot.slane %v71, %v75
    %v80 = vunpack.c.l.b16 %v69
    %v81 = vunpack.c.l.b16 %v70
    %v82 = vpack.c.b16 %v81, %v80
    %vm84 = vcmask 130048
    %v86 = vsel %vm84, %v68, 0
    %88 = vmatprep.subr.bf16.mxu0 0
    %89 = vmatpush1.bf16.msra.mxu0 %v82
    %90 = vmatprep.subr.bf16.mxu0 0
    %91 = vmatpush1.bf16.msra.mxu0 0
    %92 = vmatprep.subr.bf16.mxu0 0
    %93 = vmatpush1.bf16.msra.mxu0 0
    %94 = vmatprep.subr.bf16.mxu0 0
    %95 = vmatpush1.bf16.msra.mxu0 0
    %96 = vmatprep.subr.bf16.mxu0 0
    %97 = vmatpush1.bf16.msra.mxu0 0
    %98 = vmatprep.subr.bf16.mxu0 0
    %99 = vmatpush1.bf16.msra.mxu0 0
    %100 = vmatprep.subr.bf16.mxu0 0
    %101 = vmatpush1.bf16.msra.mxu0 0
    %102 = vmatprep.subr.bf16.mxu0 0
    %103 = vmatpush1.bf16.msra.mxu0 0
    %104 = vmatprep.subr.bf16.mxu0 0
    %105 = vmatpush1.bf16.msra.mxu0 0
    %106 = vmatprep.subr.bf16.mxu0 0
    %107 = vmatpush1.bf16.msra.mxu0 0
    %108 = vmatprep.subr.bf16.mxu0 0
    %109 = vmatpush1.bf16.msra.mxu0 0
    %110 = vmatprep.subr.bf16.mxu0 0
    %111 = vmatpush1.bf16.msra.mxu0 0
    %112 = vmatprep.subr.bf16.mxu0 0
    %113 = vmatpush1.bf16.msra.mxu0 0
    %114 = vmatprep.subr.bf16.mxu0 0
    %115 = vmatpush1.bf16.msra.mxu0 0
    %116 = vmatprep.subr.bf16.mxu0 0
    %117 = vmatpush1.bf16.msra.mxu0 0
    %118 = vmatprep.subr.bf16.mxu0 0
    %119 = vmatpush1.bf16.msra.mxu0 0
    %120 = vmatprep.mubr.bf16.mxu0 0
    %121 = vmatmul.mubr.bf16.gmra.mrb[0].mxu0 %v86
    %v122 = vpop.f32.mrb[0].mxu0
    %v123 = vadd.f32 %v76, %v122
    %v124 = vpop.f32.mrb[0].mxu0
    %v125 = vpop.f32.mrb[0].mxu0
    %v126 = vpop.f32.mrb[0].mxu0
    %127 = vdwg.mxu0
    %v128 = vmax.f32 %v123, 0.0
    %v129 = vpack.c.bf16 %v128, %v128
    %v130 = vld [vmem:[#allocation7] sm:$0xf]
    %v131 = vld [vmem:[#allocation7 + $0x4] sm:$0xf]
    %v132 = vld [vmem:[#allocation7 + $0x8] sm:$0xf]
    %v133 = vld [vmem:[#allocation7 + $0xc] sm:$0xf]
    %v134 = vld [vmem:[%s4] sm:$0x1]
    %v136 = vlaneseq
    %v137 = vshrl.u32 %v136, 7
    %v138 = vsub.s32 0, %v137
    %v139 = vrot.slane %v134, %v138
    %v145 = vunpack.c.l.b16 %v130
    %v146 = vunpack.c.l.b16 %v131
    %v147 = vunpack.c.l.b16 %v132
    %v148 = vunpack.c.l.b16 %v133
    %v149 = vpack.c.b16 %v146, %v145
    %v150 = vpack.c.b16 %v148, %v147
    %vm153 = vcmask 261120
    %v155 = vsel %vm153, %v129, 0
    %157 = vmatprep.subr.bf16.mxu0 0
    %158 = vmatpush1.bf16.msra.mxu0 %v149
    %159 = vmatprep.subr.bf16.mxu0 0
    %160 = vmatpush1.bf16.msra.mxu0 %v150
    %161 = vmatprep.subr.bf16.mxu0 0
    %162 = vmatpush1.bf16.msra.mxu0 0
    %163 = vmatprep.subr.bf16.mxu0 0
    %164 = vmatpush1.bf16.msra.mxu0 0
    %165 = vmatprep.subr.bf16.mxu0 0
    %166 = vmatpush1.bf16.msra.mxu0 0
    %167 = vmatprep.subr.bf16.mxu0 0
    %168 = vmatpush1.bf16.msra.mxu0 0
    %169 = vmatprep.subr.bf16.mxu0 0
    %170 = vmatpush1.bf16.msra.mxu0 0
    %171 = vmatprep.subr.bf16.mxu0 0
    %172 = vmatpush1.bf16.msra.mxu0 0
    %173 = vmatprep.subr.bf16.mxu0 0
    %174 = vmatpush1.bf16.msra.mxu0 0
    %175 = vmatprep.subr.bf16.mxu0 0
    %176 = vmatpush1.bf16.msra.mxu0 0
    %177 = vmatprep.subr.bf16.mxu0 0
    %178 = vmatpush1.bf16.msra.mxu0 0
    %179 = vmatprep.subr.bf16.mxu0 0
    %180 = vmatpush1.bf16.msra.mxu0 0
    %181 = vmatprep.subr.bf16.mxu0 0
    %182 = vmatpush1.bf16.msra.mxu0 0
    %183 = vmatprep.subr.bf16.mxu0 0
    %184 = vmatpush1.bf16.msra.mxu0 0
    %185 = vmatprep.subr.bf16.mxu0 0
    %186 = vmatpush1.bf16.msra.mxu0 0
    %187 = vmatprep.subr.bf16.mxu0 0
    %188 = vmatpush1.bf16.msra.mxu0 0
    %189 = vmatprep.mubr.bf16.mxu0 0
    %190 = vmatmul.mubr.bf16.gmra.mrb[0].mxu0 %v155
    %v191 = vpop.f32.mrb[0].mxu0
    %v192 = vadd.f32 %v139, %v191
    %v193 = vpop.f32.mrb[0].mxu0
    %v194 = vpop.f32.mrb[0].mxu0
    %v195 = vpop.f32.mrb[0].mxu0
    %196 = vdwg.mxu0
    %v197 = vmax.f32 %v192, 0.0
    %v198 = vld [vmem:[%s5] sm:$0x1]
    %v200 = vlaneseq
    %v201 = vshrl.u32 %v200, 7
    %v202 = vsub.s32 0, %v201
    %v203 = vrot.slane %v198, %v202
    %v205 = vmul.f32 %v197, %v203
    %v206 = vsel %vm153, %v205, 0.0
    %207 = vadd.xlane.f32.xlu0 %v206
    %v208 = vpop.xlane.xlu0 %207
    %v209 = vld [vmem:[#allocation2] sm:$0x1]
    %v211 = vlaneseq
    %v212 = vshrl.u32 %v211, 7
    %v213 = vsub.s32 0, %v212
    %v214 = vrot.slane %v209, %v213
    %v216 = vadd.f32 %v208, %v214
    %vm217 = vcmask 7168
    %218 = vst.msk [vmem:[%s7] sm:$0xff] %vm217, %v216
    // Predicated region
    $region42: #{tpu_custom_call.1} parent=1 // pred_check
      _
    $region43: #{tpu_custom_call.1} parent=1 // pred_check_branch
      %220 = sbr.rel (0) target = $region45
    $region44: #{tpu_custom_call.1} parent=1 // pred_region
      _
    $region45: #{tpu_custom_call.1} parent=1 // pred_fallthru
      _
    // Predicated region
    $region46: #{tpu_custom_call.1} parent=1 // pred_check
      _
    $region47: #{tpu_custom_call.1} parent=1 // pred_check_branch
      %222 = sbr.rel (0) target = $region49
    $region48: #{tpu_custom_call.1} parent=1 // pred_region
      _
    $region49: #{tpu_custom_call.1} parent=1 // pred_fallthru
      _
    %223 = vsyncpa [#allocation4], 1
    %224 = vsyncpa [#allocation6], 1

</llo_original>
